<compile_context>
chip_gen: v7x
topology: tpu7x:2x2x1
jax: 0.10.0
libtpu: 0.0.40
codegen_flags: <defaults>
</compile_context>

<pallas_src>
import functools

import jax
import jax.numpy as jnp
from jax import lax
from jax.experimental import pallas as pl
from jax.experimental.pallas import tpu as pltpu

_LOSS_CHANNELS = 32
_TARGET_BLOCK_BYTES = 2 * 1024 * 1024   # ~2 MiB of pred per grid step


def _hxqloss1_kernel(pred_ref, gt_ref, out_ref, *, hw, tile_n):
    """One grid step: reduce a [b_blk, 32, tile_n] pred block to a scalar partial.

    pred_ref: [b_blk, C, tile_n]   gt_ref: [b_blk, 1, tile_n]
    out_ref : [1, 1] SMEM -- partial sum for this (batch-block, lane-tile).
    """
    t = pl.program_id(1)

    p = pred_ref[...].astype(jnp.float32)              # [b_blk, 32, tile_n]
    g = gt_ref[...].astype(jnp.float32)                # [b_blk, 1, tile_n]

    # Per-lane sufficient statistics over the channel (sublane) axis.
    s1 = jnp.sum(p, axis=1, keepdims=True)             # [b_blk, 1, tile_n]
    s2 = jnp.sum(p * p, axis=1, keepdims=True)         # [b_blk, 1, tile_n]

    # sum_i [0.5*(p_i-g)^2 - 0.1*(p_i-pf)^2]  with pf = s1/C reduces to:
    c = float(_LOSS_CHANNELS)
    contrib = (0.4 * s2
               - g * s1
               + (0.5 * c) * (g * g)
               + (0.1 / c) * (s1 * s1))                # [b_blk, 1, tile_n]

    if hw % tile_n != 0:
        # Remainder lane tile: zero out out-of-range (padded) lanes.
        lane = lax.broadcasted_iota(jnp.int32, contrib.shape, 2)
        valid = (t * tile_n + lane) < hw
        contrib = jnp.where(valid, contrib, 0.0)

    out_ref[0, 0] = jnp.sum(contrib)                   # one cross-lane reduce / step


def hxqloss1(pred, gt, *, max_tile_n=None):
    """pred: [B, 32, H, W] (or [32, H, W]); gt: [B, H, W] / [B, 1, H, W].

    Returns the scalar loss (float32).  Pass pred/gt in their native dtype
    (bf16 stays bf16 in HBM; the kernel upcasts in-register, accumulates f32).
    `max_tile_n` (multiple of 128) optionally overrides the lane-tile cap.
    """
    pred = jnp.asarray(pred)
    gt = jnp.asarray(gt)
    if pred.ndim == 3:                 # [32, H, W] path of the original module
        pred = pred[None]
        gt = gt.reshape((1,) + gt.shape[-2:])
    B, C, H, W = pred.shape
    assert C == _LOSS_CHANNELS, "hxqloss1 hardcodes loss_channel = 32"

    HW = H * W
    N = B * HW

    # ---- Block-size selection: target ~2 MiB of pred per grid step ----------
    itemsize = jnp.dtype(pred.dtype).itemsize
    if max_tile_n is None:
        max_tile_n = max(128, (_TARGET_BLOCK_BYTES // (C * itemsize)) // 128 * 128)

    if HW <= max_tile_n:
        # Whole image fits in one lane tile (full-dim block: always legal).
        # Block batch elements together so per-step DMA amortizes grid overhead.
        tile_n = HW
        num_tiles = 1
        per_elem_bytes = C * HW * itemsize
        desired = max(1, _TARGET_BLOCK_BYTES // per_elem_bytes)
        b_blk = 1
        for d in range(B, 0, -1):      # largest divisor of B that is <= desired
            if B % d == 0 and d <= desired:
                b_blk = d
                break
    else:
        tile_n = max_tile_n            # multiple of 128
        num_tiles = (HW + tile_n - 1) // tile_n
        b_blk = 1
    num_b_blocks = B // b_blk

    # Layout plumbing: contiguous reshapes only (no transpose, no HBM traffic).
    pred3 = pred.reshape(B, C, HW)
    gt3 = gt.reshape(B, 1, HW)         # avoids squeeze() edge cases (H==1, W==1)

    kernel = functools.partial(_hxqloss1_kernel, hw=HW, tile_n=tile_n)

    partials = pl.pallas_call(
        kernel,
        out_shape=jax.ShapeDtypeStruct((num_b_blocks, num_tiles), jnp.float32),
        grid=(num_b_blocks, num_tiles),
        in_specs=[
            pl.BlockSpec((b_blk, C, tile_n), lambda b, t: (b, 0, t)),
            pl.BlockSpec((b_blk, 1, tile_n), lambda b, t: (b, 0, t)),
        ],
        out_specs=pl.BlockSpec((1, 1), lambda b, t: (b, t),
                               memory_space=pltpu.SMEM),
        compiler_params=pltpu.CompilerParams(
            dimension_semantics=("parallel", "parallel")),
    )(pred3, gt3)

    return jnp.sum(partials) / jnp.float32(N)


def hxqloss1_ref(pred, gt):
    """Pure-JAX reference mirroring the PyTorch loop."""
    pred_final = jnp.mean(pred, axis=-3)
    gt_s = gt.reshape(pred_final.shape)
    loss = 0.0
    for i in range(_LOSS_CHANNELS):
        G1 = pred[:, i, :, :]
        loss = loss + 0.5 * jnp.mean(jnp.abs(G1 - gt_s) * jnp.abs(G1 - gt_s)) \
                    - 0.1 * jnp.mean(jnp.abs(G1 - pred_final) * jnp.abs(G1 - pred_final))
    return loss


if __name__ == "__main__":
    key = jax.random.PRNGKey(0)
    kp, kg, kp2, kg2, kp3, kg3 = jax.random.split(key, 6)

    # Test 1: small shape -> batch-blocking path (b_blk=2, single lane tile).
    B, C, H, W = 2, 32, 16, 16
    pred = jax.random.normal(kp, (B, C, H, W), dtype=jnp.float32)
    gt = jax.random.normal(kg, (B, H, W), dtype=jnp.float32)
    loss = hxqloss1(pred, gt)
    jax.block_until_ready(loss)
    ref = hxqloss1_ref(pred, gt)
    assert jnp.allclose(loss, ref, rtol=1e-5, atol=1e-4), (loss, ref)

    # Test 2: forces the multi-tile streaming path + remainder-lane masking
    # (H*W = 400 with a 256-lane tile cap -> full tile + partial 144-lane tile).
    B2, H2, W2 = 2, 20, 20
    pred2 = jax.random.normal(kp2, (B2, C, H2, W2), dtype=jnp.float32)
    gt2 = jax.random.normal(kg2, (B2, H2, W2), dtype=jnp.float32)
    loss2 = hxqloss1(pred2, gt2, max_tile_n=256)
    jax.block_until_ready(loss2)
    ref2 = hxqloss1_ref(pred2, gt2)
    assert jnp.allclose(loss2, ref2, rtol=1e-5, atol=1e-4), (loss2, ref2)

    # Test 3: bf16 end-to-end (no pre-cast in the wrapper; f32 accumulation
    # inside the kernel).  Reference computed in f32 from the same bf16 values.
    pred3 = jax.random.normal(kp3, (B, C, H, W), dtype=jnp.bfloat16)
    gt3 = jax.random.normal(kg3, (B, H, W), dtype=jnp.bfloat16)
    loss3 = hxqloss1(pred3, gt3)
    jax.block_until_ready(loss3)
    ref3 = hxqloss1_ref(pred3.astype(jnp.float32), gt3.astype(jnp.float32))
    assert jnp.allclose(loss3, ref3, rtol=5e-3, atol=5e-3), (loss3, ref3)

    print("KERNEL_OK")
</pallas_src>

<mosaic_0001>
module attributes {stable_mosaic.version = 11 : i64} {
  func.func @_hxqloss1_kernel(%arg0: i32, %arg1: i32, %arg2: memref<2x32x256xf32, #tpu.memory_space<vmem>>, %arg3: memref<2x1x256xf32, #tpu.memory_space<vmem>>, %arg4: memref<1x1xf32, #tpu.memory_space<smem>>) attributes {dimension_semantics = [#tpu.dimension_semantics<parallel>, #tpu.dimension_semantics<parallel>], iteration_bounds = array<i64: 1, 1>, scalar_prefetch = 0 : i64, scratch_operands = 0 : i64, tpu.core_type = #tpu.core_type<tc>, window_params = [{transform_indices = @transform_0, window_bounds = array<i64: 2, 32, 256>}, {transform_indices = @transform_1, window_bounds = array<i64: 2, 1, 256>}, {transform_indices = @transform_2, window_bounds = array<i64: 1, 1>}]} {
    %c0 = arith.constant 0 : index
    %c0_0 = arith.constant 0 : index
    %c0_1 = arith.constant 0 : index
    %0 = vector.load %arg2[%c0, %c0_0, %c0_1] : memref<2x32x256xf32, #tpu.memory_space<vmem>>, vector<2x32x256xf32>
    %c0_2 = arith.constant 0 : index
    %c0_3 = arith.constant 0 : index
    %c0_4 = arith.constant 0 : index
    %1 = vector.load %arg3[%c0_2, %c0_3, %c0_4] : memref<2x1x256xf32, #tpu.memory_space<vmem>>, vector<2x1x256xf32>
    %cst = arith.constant dense<0.000000e+00> : vector<2x256xf32>
    %2 = vector.multi_reduction <add>, %0, %cst [1] : vector<2x32x256xf32> to vector<2x256xf32>
    %3 = vector.shape_cast %2 : vector<2x256xf32> to vector<2x1x256xf32>
    %4 = arith.mulf %0, %0 : vector<2x32x256xf32>
    %cst_5 = arith.constant dense<0.000000e+00> : vector<2x256xf32>
    %5 = vector.multi_reduction <add>, %4, %cst_5 [1] : vector<2x32x256xf32> to vector<2x256xf32>
    %6 = vector.shape_cast %5 : vector<2x256xf32> to vector<2x1x256xf32>
    %cst_6 = arith.constant 4.000000e-01 : f32
    %7 = vector.broadcast %cst_6 : f32 to vector<2x1x256xf32>
    %8 = arith.mulf %7, %6 : vector<2x1x256xf32>
    %9 = arith.mulf %1, %3 : vector<2x1x256xf32>
    %10 = arith.subf %8, %9 : vector<2x1x256xf32>
    %11 = arith.mulf %1, %1 : vector<2x1x256xf32>
    %cst_7 = arith.constant 1.600000e+01 : f32
    %12 = vector.broadcast %cst_7 : f32 to vector<2x1x256xf32>
    %13 = arith.mulf %12, %11 : vector<2x1x256xf32>
    %14 = arith.addf %10, %13 : vector<2x1x256xf32>
    %15 = arith.mulf %3, %3 : vector<2x1x256xf32>
    %cst_8 = arith.constant 3.125000e-03 : f32
    %16 = vector.broadcast %cst_8 : f32 to vector<2x1x256xf32>
    %17 = arith.mulf %16, %15 : vector<2x1x256xf32>
    %18 = arith.addf %14, %17 : vector<2x1x256xf32>
    %19 = vector.shape_cast %18 : vector<2x1x256xf32> to vector<1x2x1x256xf32>
    %cst_9 = arith.constant dense<0.000000e+00> : vector<1xf32>
    %20 = vector.multi_reduction <add>, %19, %cst_9 [1, 2, 3] : vector<1x2x1x256xf32> to vector<1xf32>
    %21 = vector.shape_cast %20 : vector<1xf32> to vector<1x1x1x1xf32>
    %22 = vector.extract %21[0, 0, 0, 0] : f32 from vector<1x1x1x1xf32>
    %c0_10 = arith.constant 0 : index
    %c0_11 = arith.constant 0 : index
    %23 = memref.load %arg4[%c0_10, %c0_11] : memref<1x1xf32, #tpu.memory_space<smem>>
    memref.store %22, %arg4[%c0_10, %c0_11] : memref<1x1xf32, #tpu.memory_space<smem>>
    return
  }
  func.func @transform_0(%arg0: i32, %arg1: i32) -> (i32, i32, i32) {
    %c0_i32 = arith.constant 0 : i32
    %c0_i32_0 = arith.constant 0 : i32
    return %arg0, %c0_i32, %arg1 : i32, i32, i32
  }
  func.func @transform_1(%arg0: i32, %arg1: i32) -> (i32, i32, i32) {
    %c0_i32 = arith.constant 0 : i32
    %c0_i32_0 = arith.constant 0 : i32
    return %arg0, %c0_i32, %arg1 : i32, i32, i32
  }
  func.func @transform_2(%arg0: i32, %arg1: i32) -> (i32, i32) {
    %c0_i32 = arith.constant 0 : i32
    return %arg0, %arg1 : i32, i32
  }
}

</mosaic_0001>

<llo_original>
// kernel: tpu_custom_call.1
$region0: #{tpu_custom_call.1}
  #allocation0 [shape = 'u32[]', space=smem, size = 0x4, offset = 0x4, fixed_abs, tag = 'smem constant byte address 0x4 - core index']
  #allocation1 [shape = 'u32[144,128]{1,0:T(1,128)}', space=vmem, size = 0x12000, scoped, tag = 'internal scratch']
  %s0 = inlined_call_operand.hbm [shape: f32[2,32,256], index: 0, kind: input, shape index: {}]
  %s1 = inlined_call_operand.hbm [shape: f32[2,1,256], index: 1, kind: input, shape index: {}]
  %s2 = inlined_call_operand.hbm [shape: f32[1,1], index: 2, kind: output, shape index: {}]
  %s3 = sld [smem:[#allocation0]]
  $region26: #{tpu_custom_call.1} parent=0
    _
  %s5 = ssub.s32 1, %s3
  %s6 = scalar_select 0, %s5, %s3
  $region1: #{tpu_custom_call.1} parent=0
    #allocation2 [shape = 'u8[65536]{0}', space=vmem, size = 0x10000, scoped, tag = 'input window, operand 0, single buffered']
    #allocation3 [shape = 's32[1]{0}', space=sflag, size = 0x4, scoped, tag = 'scoped memory for tpu_custom_call.1']
    #allocation4 [shape = 's32[1]{0}', space=sflag, size = 0x4, scoped, tag = 'scoped memory for tpu_custom_call.1']
    #allocation5 [shape = 'u8[2048]{0}', space=vmem, size = 0x800, scoped, tag = 'input window, operand 1, single buffered']
    #allocation6 [shape = 's32[1]{0}', space=sflag, size = 0x4, scoped, tag = 'scoped memory for tpu_custom_call.1']
    #allocation7 [shape = 'u8[512]{0}', space=smem, size = 0x200, scoped, tag = 'output window, operand 0, single buffered']
    %7 = vsyncpa [#allocation3], 0
    %8 = vsyncpa [#allocation6], 0
    %9 = vsyncpa [#allocation4], 0
    // Predicated region
    $region2: #{tpu_custom_call.1} parent=1 // pred_check
      _
    $region3: #{tpu_custom_call.1} parent=1 // pred_check_branch
      %11 = sbr.rel (0) target = $region5
    $region4: #{tpu_custom_call.1} parent=1 // pred_region
      %s13 = ssub.s32 2048, 2048
      %14 = vsyncadd [#allocation3], %s13
      %s15 = sshll.u32 [#allocation2], 4
      %s16 = int_to_ptr.vmem [resolvable:$true] %s15
      %21 = dma.hbm_to_vmem [thread:$0]  %s0, 2048, %s16, [#allocation3], 256, 256, 16
    $region5: #{tpu_custom_call.1} parent=1 // pred_fallthru
      _
    // Predicated region
    $region6: #{tpu_custom_call.1} parent=1 // pred_check
      _
    $region7: #{tpu_custom_call.1} parent=1 // pred_check_branch
      %23 = sbr.rel (0) target = $region9
    $region8: #{tpu_custom_call.1} parent=1 // pred_region
      %s25 = ssub.s32 64, 64
      %26 = vsyncadd [#allocation6], %s25
      %s27 = sshll.u32 [#allocation5], 4
      %s28 = int_to_ptr.vmem [resolvable:$true] %s27
      %33 = dma.hbm_to_vmem [thread:$0]  %s1, 64, %s28, [#allocation6], 32, 32, 2
    $region9: #{tpu_custom_call.1} parent=1 // pred_fallthru
      _
    // Predicated region
    $region10: #{tpu_custom_call.1} parent=1 // pred_check
      _
    $region11: #{tpu_custom_call.1} parent=1 // pred_check_branch
      %35 = sbr.rel (0) target = $region13
    $region12: #{tpu_custom_call.1} parent=1 // pred_region
      %36 = dma.done [#allocation3], 2048
    $region13: #{tpu_custom_call.1} parent=1 // pred_fallthru
      _
    // Predicated region
    $region14: #{tpu_custom_call.1} parent=1 // pred_check
      _
    $region15: #{tpu_custom_call.1} parent=1 // pred_check_branch
      %38 = sbr.rel (0) target = $region17
    $region16: #{tpu_custom_call.1} parent=1 // pred_region
      %39 = dma.done [#allocation6], 64
    $region17: #{tpu_custom_call.1} parent=1 // pred_fallthru
      _
    %v40 = vld [vmem:[#allocation2] sm:$0xff]
    %v41 = vld [vmem:[#allocation2 + $0x8] sm:$0xff]
    %v42 = vld [vmem:[#allocation2 + $0x10] sm:$0xff]
    %v43 = vld [vmem:[#allocation2 + $0x18] sm:$0xff]
    %v44 = vld [vmem:[#allocation2 + $0x20] sm:$0xff]
    %v45 = vld [vmem:[#allocation2 + $0x28] sm:$0xff]
    %v46 = vld [vmem:[#allocation2 + $0x30] sm:$0xff]
    %v47 = vld [vmem:[#allocation2 + $0x38] sm:$0xff]
    %v48 = vld [vmem:[#allocation2 + $0x40] sm:$0xff]
    %v49 = vld [vmem:[#allocation2 + $0x48] sm:$0xff]
    %v50 = vld [vmem:[#allocation2 + $0x50] sm:$0xff]
    %v51 = vld [vmem:[#allocation2 + $0x58] sm:$0xff]
    %v52 = vld [vmem:[#allocation2 + $0x60] sm:$0xff]
    %v53 = vld [vmem:[#allocation2 + $0x68] sm:$0xff]
    %v54 = vld [vmem:[#allocation2 + $0x70] sm:$0xff]
    %v55 = vld [vmem:[#allocation2 + $0x78] sm:$0xff]
    %v56 = vld [vmem:[#allocation5] sm:$0x3]
    %v57 = vld [vmem:[#allocation5 + $0x2] sm:$0x3]
    %v58 = vadd.f32 %v40, %v42
    %v59 = vadd.f32 %v58, %v44
    %v60 = vadd.f32 %v59, %v46
    %v61 = vrot.slane %v60, 4
    %v62 = vadd.f32 %v60, %v61
    %v63 = vrot.slane %v62, 2
    %v64 = vadd.f32 %v62, %v63
    %v65 = vrot.slane %v64, 1
    %v66 = vadd.f32 %v64, %v65
    %v67 = vadd.f32 %v41, %v43
    %v68 = vadd.f32 %v67, %v45
    %v69 = vadd.f32 %v68, %v47
    %v70 = vrot.slane %v69, 4
    %v71 = vadd.f32 %v69, %v70
    %v72 = vrot.slane %v71, 2
    %v73 = vadd.f32 %v71, %v72
    %v74 = vrot.slane %v73, 1
    %v75 = vadd.f32 %v73, %v74
    %v76 = vadd.f32 %v48, %v50
    %v77 = vadd.f32 %v76, %v52
    %v78 = vadd.f32 %v77, %v54
    %v79 = vrot.slane %v78, 4
    %v80 = vadd.f32 %v78, %v79
    %v81 = vrot.slane %v80, 2
    %v82 = vadd.f32 %v80, %v81
    %v83 = vrot.slane %v82, 1
    %v84 = vadd.f32 %v82, %v83
    %v85 = vadd.f32 %v49, %v51
    %v86 = vadd.f32 %v85, %v53
    %v87 = vadd.f32 %v86, %v55
    %v88 = vrot.slane %v87, 4
    %v89 = vadd.f32 %v87, %v88
    %v90 = vrot.slane %v89, 2
    %v91 = vadd.f32 %v89, %v90
    %v92 = vrot.slane %v91, 1
    %v93 = vadd.f32 %v91, %v92
    %v94 = vmul.f32 %v40, %v40
    %v95 = vmul.f32 %v41, %v41
    %v96 = vmul.f32 %v42, %v42
    %v97 = vmul.f32 %v43, %v43
    %v98 = vmul.f32 %v44, %v44
    %v99 = vmul.f32 %v45, %v45
    %v100 = vmul.f32 %v46, %v46
    %v101 = vmul.f32 %v47, %v47
    %v102 = vmul.f32 %v48, %v48
    %v103 = vmul.f32 %v49, %v49
    %v104 = vmul.f32 %v50, %v50
    %v105 = vmul.f32 %v51, %v51
    %v106 = vmul.f32 %v52, %v52
    %v107 = vmul.f32 %v53, %v53
    %v108 = vmul.f32 %v54, %v54
    %v109 = vmul.f32 %v55, %v55
    %v110 = vadd.f32 %v94, %v96
    %v111 = vadd.f32 %v110, %v98
    %v112 = vadd.f32 %v111, %v100
    %v113 = vrot.slane %v112, 4
    %v114 = vadd.f32 %v112, %v113
    %v115 = vrot.slane %v114, 2
    %v116 = vadd.f32 %v114, %v115
    %v117 = vrot.slane %v116, 1
    %v118 = vadd.f32 %v116, %v117
    %v119 = vadd.f32 %v95, %v97
    %v120 = vadd.f32 %v119, %v99
    %v121 = vadd.f32 %v120, %v101
    %v122 = vrot.slane %v121, 4
    %v123 = vadd.f32 %v121, %v122
    %v124 = vrot.slane %v123, 2
    %v125 = vadd.f32 %v123, %v124
    %v126 = vrot.slane %v125, 1
    %v127 = vadd.f32 %v125, %v126
    %v128 = vadd.f32 %v102, %v104
    %v129 = vadd.f32 %v128, %v106
    %v130 = vadd.f32 %v129, %v108
    %v131 = vrot.slane %v130, 4
    %v132 = vadd.f32 %v130, %v131
    %v133 = vrot.slane %v132, 2
    %v134 = vadd.f32 %v132, %v133
    %v135 = vrot.slane %v134, 1
    %v136 = vadd.f32 %v134, %v135
    %v137 = vadd.f32 %v103, %v105
    %v138 = vadd.f32 %v137, %v107
    %v139 = vadd.f32 %v138, %v109
    %v140 = vrot.slane %v139, 4
    %v141 = vadd.f32 %v139, %v140
    %v142 = vrot.slane %v141, 2
    %v143 = vadd.f32 %v141, %v142
    %v144 = vrot.slane %v143, 1
    %v145 = vadd.f32 %v143, %v144
    %v146 = vmul.f32 %v118, 0.4
    %v147 = vmul.f32 %v127, 0.4
    %v148 = vmul.f32 %v136, 0.4
    %v149 = vmul.f32 %v145, 0.4
    %v154 = vcombine.low %v66, %v75
    %v156 = vunpack.c.l.s4 1966171168
    %v157 = vunpack.c.0.s8 %v156
    %v158 = vlaneseq
    %v159 = vshrl.u32 %v158, 7
    %v160 = vsub.s32 %v157, %v159
    %v161 = vrot.slane %v154, %v160
    %v163 = vunpack.c.l.s4 1966171168
    %v164 = vunpack.c.0.s8 %v163
    %v165 = vlaneseq
    %v166 = vshrl.u32 %v165, 7
    %v167 = vsub.s32 %v164, %v166
    %v168 = vrot.slane %v161, %v167
    %v169 = vcombine.low %v84, %v93
    %v171 = vunpack.c.l.s4 1966171168
    %v172 = vunpack.c.0.s8 %v171
    %v173 = vlaneseq
    %v174 = vshrl.u32 %v173, 7
    %v175 = vsub.s32 %v172, %v174
    %v176 = vrot.slane %v169, %v175
    %v178 = vunpack.c.l.s4 1966171168
    %v179 = vunpack.c.0.s8 %v178
    %v180 = vlaneseq
    %v181 = vshrl.u32 %v180, 7
    %v182 = vsub.s32 %v179, %v181
    %v183 = vrot.slane %v176, %v182
    %v186 = vmul.f32 %v56, %v168
    %v187 = vmul.f32 %v57, %v183
    %v190 = vlaneseq
    %v191 = vshrl.u32 %v190, 7
    %v192 = vsub.s32 0, %v191
    %v193 = vrot.slane %v186, %v192
    %v194 = vlaneseq
    %v195 = vshrl.u32 %v194, 7
    %v196 = vsub.s32 1, %v195
    %v197 = vrot.slane %v186, %v196
    %v198 = vlaneseq
    %v199 = vshrl.u32 %v198, 7
    %v200 = vsub.s32 0, %v199
    %v201 = vrot.slane %v187, %v200
    %v202 = vlaneseq
    %v203 = vshrl.u32 %v202, 7
    %v204 = vsub.s32 1, %v203
    %v205 = vrot.slane %v187, %v204
    %v210 = vsub.f32 %v146, %v193
    %v211 = vsub.f32 %v147, %v197
    %v212 = vsub.f32 %v148, %v201
    %v213 = vsub.f32 %v149, %v205
    %v214 = vmul.f32 %v56, %v56
    %v215 = vmul.f32 %v57, %v57
    %v216 = vmul.f32 %v214, 16.0
    %v217 = vmul.f32 %v215, 16.0
    %v220 = vlaneseq
    %v221 = vshrl.u32 %v220, 7
    %v222 = vsub.s32 0, %v221
    %v223 = vrot.slane %v216, %v222
    %v224 = vlaneseq
    %v225 = vshrl.u32 %v224, 7
    %v226 = vsub.s32 1, %v225
    %v227 = vrot.slane %v216, %v226
    %v228 = vlaneseq
    %v229 = vshrl.u32 %v228, 7
    %v230 = vsub.s32 0, %v229
    %v231 = vrot.slane %v217, %v230
    %v232 = vlaneseq
    %v233 = vshrl.u32 %v232, 7
    %v234 = vsub.s32 1, %v233
    %v235 = vrot.slane %v217, %v234
    %v240 = vadd.f32 %v210, %v223
    %v241 = vadd.f32 %v211, %v227
    %v242 = vadd.f32 %v212, %v231
    %v243 = vadd.f32 %v213, %v235
    %v244 = vmul.f32 %v66, %v66
    %v245 = vmul.f32 %v75, %v75
    %v246 = vmul.f32 %v84, %v84
    %v247 = vmul.f32 %v93, %v93
    %v248 = vmul.f32 %v244, 0.003125
    %v249 = vmul.f32 %v245, 0.003125
    %v250 = vmul.f32 %v246, 0.003125
    %v251 = vmul.f32 %v247, 0.003125
    %v252 = vadd.f32 %v240, %v248
    %v253 = vadd.f32 %v241, %v249
    %v254 = vadd.f32 %v242, %v250
    %v255 = vadd.f32 %v243, %v251
    %vm256 = vcmask 1040384
    %v257 = vsel %vm256, %v252, 0.0
    %v258 = vsel %vm256, %v253, 0.0
    %v259 = vadd.f32 %v257, %v258
    %v260 = vsel %vm256, %v254, 0.0
    %v261 = vadd.f32 %v259, %v260
    %v262 = vsel %vm256, %v255, 0.0
    %v263 = vadd.f32 %v261, %v262
    %264 = vadd.xlane.f32.xlu0 %v263
    %v265 = vpop.xlane.xlu0 %264
    %v266 = vrot.slane %v265, 4
    %v267 = vadd.f32 %v265, %v266
    %v268 = vrot.slane %v267, 2
    %v269 = vadd.f32 %v267, %v268
    %v270 = vrot.slane %v269, 1
    %v271 = vadd.f32 %v269, %v270
    %s272 = vtos %v271
    %s273 = scalar_lea.smem [#allocation7], 0
    %274 = sst [smem:[%s273]] %s272
    // Predicated region
    $region18: #{tpu_custom_call.1} parent=1 // pred_check
      _
    $region19: #{tpu_custom_call.1} parent=1 // pred_check_branch
      %276 = sbr.rel (0) target = $region21
    $region20: #{tpu_custom_call.1} parent=1 // pred_region
      %s278 = ssub.s32 16, 16
      %279 = vsyncadd [#allocation4], %s278
      %282 = dma.smem_to_hbm [#allocation7], 16, %s2, [#allocation4]
    $region21: #{tpu_custom_call.1} parent=1 // pred_fallthru
      _
    // Predicated region
    $region22: #{tpu_custom_call.1} parent=1 // pred_check
      _
    $region23: #{tpu_custom_call.1} parent=1 // pred_check_branch
      %284 = sbr.rel (0) target = $region25
    $region24: #{tpu_custom_call.1} parent=1 // pred_region
      %285 = dma.done [#allocation4], 16
    $region25: #{tpu_custom_call.1} parent=1 // pred_fallthru
      _
    %286 = sfence
    %287 = vsyncpa [#allocation3], 1
    %288 = vsyncpa [#allocation6], 1
    %289 = vsyncpa [#allocation4], 1

</llo_original>
